<compile_context>
chip_gen: v5e
topology: v5e:2x2
jax: 0.10.0
libtpu: 0.0.40
codegen_flags: <defaults>
</compile_context>

<pallas_src>
import jax
import jax.numpy as jnp
from jax.experimental import pallas as pl
from jax.experimental.pallas import tpu as pltpu

# Default limits, as in the PyTorch module.
LIMITS = ((0.0, 20.0), (20.0, 80.0), (80.0, 100.0))
MIN_L = LIMITS[0][0]
MAX_L = LIMITS[2][1]

_LANES = 128                 # vreg lane width: lane-dense DMA / store shapes
_ZBUF_BYTES_MAX = 1 << 20    # cap the zero-fill staging buffer at 1 MiB


def _lane_dense_2d(x):
    """Flatten to a lane-dense 2-D view: (rows, 128) when the size allows."""
    total = x.size
    if total % _LANES == 0:
        return x.reshape(total // _LANES, _LANES)
    # TODO(synk): pad-to-128 path for element counts not divisible by 128.
    lead = max(1, total // x.shape[-1])
    return x.reshape(lead, x.shape[-1])


def _modality_drop_kernel(flags_ref, a_hbm, v_hbm, ao_hbm, vo_hbm, zbuf, sem):
    """flags_ref: SMEM (2,) int32 = [drop_audio, drop_video].

    a_hbm/v_hbm are aliased to ao_hbm/vo_hbm, so the keep path is a no-op
    (zero HBM traffic).  The drop path DMA-streams zeros from `zbuf` to the
    aliased HBM output (write-only; the dropped input is never read).
    """
    del a_hbm, v_hbm  # aliased with the outputs; never read

    def zero_fill(out_hbm):
        zbuf[...] = jnp.zeros_like(zbuf)
        rows, width = out_hbm.shape
        zrows = zbuf.shape[0]
        # Static (trace-time) chunking: start every DMA first, then wait for
        # all of them, so the zero-fill writes overlap each other.
        copies = []
        off = 0
        while off < rows:
            chunk = min(zrows, rows - off)
            cp = pltpu.make_async_copy(
                zbuf.at[pl.ds(0, chunk), pl.ds(0, width)],
                out_hbm.at[pl.ds(off, chunk), :],
                sem,
            )
            cp.start()
            copies.append(cp)
            off += chunk
        for cp in copies:
            cp.wait()

    @pl.when(flags_ref[0] != 0)
    def _():
        zero_fill(ao_hbm)

    @pl.when(flags_ref[1] != 0)
    def _():
        zero_fill(vo_hbm)


@jax.jit
def modality_drop_augmentation(a, v, key):
    """JAX wrapper. a: audio (B, T, F); v: video NCHW (B, C, H, W)."""
    assert a.dtype == v.dtype, "shared zero buffer assumes a single dtype"

    # Scalar draw + range tests stay in plain-JAX glue; the kernel only sees
    # two int32 drop flags.
    choice = jax.random.uniform(
        key, (), dtype=jnp.float32, minval=MIN_L, maxval=MAX_L
    )
    drop_a = jnp.logical_and(choice >= LIMITS[0][0], choice < LIMITS[0][1])
    drop_v = jnp.logical_and(choice >= LIMITS[2][0], choice <= LIMITS[2][1])
    flags = jnp.stack([drop_a, drop_v]).astype(jnp.int32)

    a2 = _lane_dense_2d(a)
    v2 = _lane_dense_2d(v)

    elem_bytes = jnp.dtype(a.dtype).itemsize
    zwidth = max(a2.shape[1], v2.shape[1])
    zrows_cap = max(1, _ZBUF_BYTES_MAX // (zwidth * elem_bytes))
    zrows = min(max(a2.shape[0], v2.shape[0]), zrows_cap)

    out_a2, out_v2 = pl.pallas_call(
        _modality_drop_kernel,
        out_shape=(
            jax.ShapeDtypeStruct(a2.shape, a2.dtype),
            jax.ShapeDtypeStruct(v2.shape, v2.dtype),
        ),
        in_specs=[
            pl.BlockSpec(memory_space=pltpu.MemorySpace.SMEM),  # drop flags
            pl.BlockSpec(memory_space=pl.ANY),                  # audio (HBM)
            pl.BlockSpec(memory_space=pl.ANY),                  # video (HBM)
        ],
        out_specs=(
            pl.BlockSpec(memory_space=pl.ANY),
            pl.BlockSpec(memory_space=pl.ANY),
        ),
        scratch_shapes=[
            pltpu.VMEM((zrows, zwidth), a.dtype),   # zero staging buffer
            pltpu.SemaphoreType.DMA(()),            # DMA completion sem
        ],
        # flags is input 0 -> audio (1) aliases out 0, video (2) aliases out 1.
        input_output_aliases={1: 0, 2: 1},
    )(flags, a2, v2)

    return out_a2.reshape(a.shape), out_v2.reshape(v.shape)


if __name__ == "__main__":
    root = jax.random.PRNGKey(0)
    k_a, k_v, k_choice = jax.random.split(root, 3)

    # audio: (batch=2, seq=8, features=32); video NCHW: (2, 4, 16, 16)
    a = jax.random.normal(k_a, (2, 8, 32), dtype=jnp.float32)
    v = jax.random.normal(k_v, (2, 4, 16, 16), dtype=jnp.float32)

    # Check against a pure-JAX reference over several keys (exercises the
    # drop-audio / keep / drop-video branches with the same compiled kernel).
    keys = [k_choice] + [jax.random.PRNGKey(i) for i in range(1, 6)]
    for kc in keys:
        choice = jax.random.uniform(
            kc, (), dtype=jnp.float32, minval=MIN_L, maxval=MAX_L
        )
        ref_a = jnp.where(
            (choice >= LIMITS[0][0]) & (choice < LIMITS[0][1]),
            jnp.zeros_like(a), a,
        )
        ref_v = jnp.where(
            (choice >= LIMITS[2][0]) & (choice <= LIMITS[2][1]),
            jnp.zeros_like(v), v,
        )

        out_a, out_v = modality_drop_augmentation(a, v, kc)
        out_a = jax.block_until_ready(out_a)
        out_v = jax.block_until_ready(out_v)

        assert out_a.shape == a.shape and out_a.dtype == a.dtype
        assert out_v.shape == v.shape and out_v.dtype == v.dtype
        assert jnp.array_equal(out_a, ref_a)
        assert jnp.array_equal(out_v, ref_v)

    print("KERNEL_OK")
</pallas_src>

<mosaic_0001>
module attributes {stable_mosaic.version = 11 : i64} {
  func.func @_modality_drop_kernel(%arg0: memref<2xi32, #tpu.memory_space<smem>>, %arg1: memref<4x128xf32, #tpu.memory_space<any>>, %arg2: memref<16x128xf32, #tpu.memory_space<any>>, %arg3: memref<4x128xf32, #tpu.memory_space<any>>, %arg4: memref<16x128xf32, #tpu.memory_space<any>>, %arg5: memref<16x128xf32, #tpu.memory_space<vmem>>, %arg6: memref<!tpu.dma_semaphore, #tpu.memory_space<semaphore_mem>>) attributes {dimension_semantics = [], scalar_prefetch = 0 : i64, scratch_operands = 2 : i64, tpu.core_type = #tpu.core_type<tc>} {
    %c0 = arith.constant 0 : index
    %0 = memref.load %arg0[%c0] : memref<2xi32, #tpu.memory_space<smem>>
    %c0_i32 = arith.constant 0 : i32
    %1 = arith.cmpi ne, %0, %c0_i32 : i32
    %2 = arith.extui %1 : i1 to i32
    %c0_i32_0 = arith.constant 0 : i32
    %3 = arith.cmpi ne, %2, %c0_i32_0 : i32
    scf.if %3 {
      %cst = arith.constant 0.000000e+00 : f32
      %8 = vector.broadcast %cst : f32 to vector<16x128xf32>
      %c0_3 = arith.constant 0 : index
      %c0_4 = arith.constant 0 : index
      %9 = vector.load %arg5[%c0_3, %c0_4] : memref<16x128xf32, #tpu.memory_space<vmem>>, vector<16x128xf32>
      tpu.vector_store %arg5[%c0_3, %c0_4], %8 {strides = array<i32>} : memref<16x128xf32, #tpu.memory_space<vmem>>, vector<16x128xf32>,
      %c0_i32_5 = arith.constant 0 : i32
      %c0_i32_6 = arith.constant 0 : i32
      %10 = tpu.memref_slice %arg5[%c0_i32_5, %c0_i32_6] : memref<16x128xf32, #tpu.memory_space<vmem>> -> memref<4x128xf32, #tpu.memory_space<vmem>>
      %c0_i32_7 = arith.constant 0 : i32
      %c0_i32_8 = arith.constant 0 : i32
      %11 = tpu.memref_slice %arg3[%c0_i32_7, %c0_i32_8] : memref<4x128xf32, #tpu.memory_space<any>> -> memref<4x128xf32, #tpu.memory_space<any>>
      tpu.enqueue_dma source(%10 : memref<4x128xf32, #tpu.memory_space<vmem>>) target(%11 : memref<4x128xf32, #tpu.memory_space<any>>) target_semaphore(%arg6 : memref<!tpu.dma_semaphore, #tpu.memory_space<semaphore_mem>>)
      %c0_i32_9 = arith.constant 0 : i32
      %c0_i32_10 = arith.constant 0 : i32
      %12 = tpu.memref_slice %arg5[%c0_i32_9, %c0_i32_10] : memref<16x128xf32, #tpu.memory_space<vmem>> -> memref<4x128xf32, #tpu.memory_space<vmem>>
      %c0_i32_11 = arith.constant 0 : i32
      %c0_i32_12 = arith.constant 0 : i32
      %13 = tpu.memref_slice %arg3[%c0_i32_11, %c0_i32_12] : memref<4x128xf32, #tpu.memory_space<any>> -> memref<4x128xf32, #tpu.memory_space<any>>
      tpu.wait_dma2 semaphore(%arg6 : memref<!tpu.dma_semaphore, #tpu.memory_space<semaphore_mem>>) src(%12 : memref<4x128xf32, #tpu.memory_space<vmem>>) dst(%13 : memref<4x128xf32, #tpu.memory_space<any>>)
    } else {
    }
    %c1 = arith.constant 1 : index
    %4 = memref.load %arg0[%c1] : memref<2xi32, #tpu.memory_space<smem>>
    %c0_i32_1 = arith.constant 0 : i32
    %5 = arith.cmpi ne, %4, %c0_i32_1 : i32
    %6 = arith.extui %5 : i1 to i32
    %c0_i32_2 = arith.constant 0 : i32
    %7 = arith.cmpi ne, %6, %c0_i32_2 : i32
    scf.if %7 {
      %cst = arith.constant 0.000000e+00 : f32
      %8 = vector.broadcast %cst : f32 to vector<16x128xf32>
      %c0_3 = arith.constant 0 : index
      %c0_4 = arith.constant 0 : index
      %9 = vector.load %arg5[%c0_3, %c0_4] : memref<16x128xf32, #tpu.memory_space<vmem>>, vector<16x128xf32>
      tpu.vector_store %arg5[%c0_3, %c0_4], %8 {strides = array<i32>} : memref<16x128xf32, #tpu.memory_space<vmem>>, vector<16x128xf32>,
      %c0_i32_5 = arith.constant 0 : i32
      %c0_i32_6 = arith.constant 0 : i32
      %10 = tpu.memref_slice %arg5[%c0_i32_5, %c0_i32_6] : memref<16x128xf32, #tpu.memory_space<vmem>> -> memref<16x128xf32, #tpu.memory_space<vmem>>
      %c0_i32_7 = arith.constant 0 : i32
      %c0_i32_8 = arith.constant 0 : i32
      %11 = tpu.memref_slice %arg4[%c0_i32_7, %c0_i32_8] : memref<16x128xf32, #tpu.memory_space<any>> -> memref<16x128xf32, #tpu.memory_space<any>>
      tpu.enqueue_dma source(%10 : memref<16x128xf32, #tpu.memory_space<vmem>>) target(%11 : memref<16x128xf32, #tpu.memory_space<any>>) target_semaphore(%arg6 : memref<!tpu.dma_semaphore, #tpu.memory_space<semaphore_mem>>)
      %c0_i32_9 = arith.constant 0 : i32
      %c0_i32_10 = arith.constant 0 : i32
      %12 = tpu.memref_slice %arg5[%c0_i32_9, %c0_i32_10] : memref<16x128xf32, #tpu.memory_space<vmem>> -> memref<16x128xf32, #tpu.memory_space<vmem>>
      %c0_i32_11 = arith.constant 0 : i32
      %c0_i32_12 = arith.constant 0 : i32
      %13 = tpu.memref_slice %arg4[%c0_i32_11, %c0_i32_12] : memref<16x128xf32, #tpu.memory_space<any>> -> memref<16x128xf32, #tpu.memory_space<any>>
      tpu.wait_dma2 semaphore(%arg6 : memref<!tpu.dma_semaphore, #tpu.memory_space<semaphore_mem>>) src(%12 : memref<16x128xf32, #tpu.memory_space<vmem>>) dst(%13 : memref<16x128xf32, #tpu.memory_space<any>>)
    } else {
    }
    return
  }
}

</mosaic_0001>

<llo_original>
// kernel: modality_drop_augmentation.1
$region0: #{modality_drop_augmentation.1}
  #allocation0 [shape = 'u32[]', space=smem, size = 0x4, offset = 0x4, fixed_abs, tag = 'smem constant byte address 0x4 - core index']
  #allocation1 [shape = 'u32[72,128]{1,0:T(1,128)}', space=vmem, size = 0x9000, scoped, tag = 'internal scratch']
  #allocation2 [shape = 'f32[16,128]{1,0:T(8,128)}', space=vmem, size = 0x2000, scoped, tag = 'scratch operand']
  #allocation3 [shape = 's32[1]{0}', space=sflag, size = 0x4, scoped, tag = 'scratch operand']
  #allocation6 [shape = 's32[]', space=sflag, size = 0x4, offset = 0, fixed_abs, tag = 'sflag constant byte address 0x0 - dummy sync flag']
  #allocation7 [shape = 's32[]', space=sflag, size = 0x4, offset = 0, fixed_abs, tag = 'sflag constant byte address 0x0 - dummy sync flag']
  %s0 = inlined_call_operand.vmem [shape: s32[2], index: 0, kind: input, shape index: {}]
  %s1 = inlined_call_operand.vmem [shape: f32[4,128], index: 1, kind: input, shape index: {}, may-alias: {1,3}]
  %s2 = inlined_call_operand.vmem [shape: f32[16,128], index: 2, kind: input, shape index: {}, may-alias: {2,4}]
  %s3 = inlined_call_operand.vmem [shape: f32[4,128], index: 3, kind: output, shape index: {0}, may-alias: {1,3}]
  %s4 = inlined_call_operand.vmem [shape: f32[16,128], index: 4, kind: output, shape index: {1}, may-alias: {2,4}]
  %5 = xla_tuple %s3, %s4
  %s6 = sld [smem:[#allocation0]]
  $region67: #{modality_drop_augmentation.1} parent=0
    _
  %s8 = ssub.s32 1, %s6
  %s9 = scalar_select 0, %s8, %s6
  $region1: #{modality_drop_augmentation.1} parent=0
    #allocation4 [shape = 'u8[512]{0}', space=smem, size = 0x200, scoped, tag = 'input window, operand 0, single buffered']
    #allocation5 [shape = 's32[1]{0}', space=sflag, size = 0x4, scoped, tag = 'scoped memory for modality_drop_augmentation.1']
    %10 = vsyncpa [#allocation5], 0
    // Predicated region
    $region2: #{modality_drop_augmentation.1} parent=1 // pred_check
      _
    $region3: #{modality_drop_augmentation.1} parent=1 // pred_check_branch
      %12 = sbr.rel (0) target = $region5
    $region4: #{modality_drop_augmentation.1} parent=1 // pred_region
      %14 = vsyncadd [#allocation5], 0
      %s16 = sshll.u32 %s0, 4
      %s17 = int_to_ptr.vmem [resolvable:$true] %s16
      %19 = dma.vmem_to_smem %s17, 16, [#allocation4], [#allocation5]
    $region5: #{modality_drop_augmentation.1} parent=1 // pred_fallthru
      _
    // Predicated region
    $region6: #{modality_drop_augmentation.1} parent=1 // pred_check
      _
    $region7: #{modality_drop_augmentation.1} parent=1 // pred_check_branch
      %21 = sbr.rel (0) target = $region9
    $region8: #{modality_drop_augmentation.1} parent=1 // pred_region
      %23 = dma.done [#allocation5], 16
    $region9: #{modality_drop_augmentation.1} parent=1 // pred_fallthru
      _
    %24 = sfence
    %s25 = sld [smem:[#allocation4]]
    %p26 = scmp.ne.s32.totalorder %s25, 0
    // Predicated region
    $region10: #{modality_drop_augmentation.1} parent=1 // pred_check
      %p27 = pneg %p26
    $region11: #{modality_drop_augmentation.1} parent=1 // pred_check_branch
      %29 = sbr.rel (%p27) target = $region13
    $region12: #{modality_drop_augmentation.1} parent=1 // pred_region
      %30 = vst [vmem:[#allocation2] sm:$0xff] 0.0
      %31 = vst [vmem:[#allocation2 + $0x8] sm:$0xff] 0.0
      // Predicated region
      $region14: #{modality_drop_augmentation.1} parent=12 // pred_check
        _
      $region15: #{modality_drop_augmentation.1} parent=12 // pred_check_branch
        %33 = sbr.rel target = $region17
      $region16: #{modality_drop_augmentation.1} parent=12 // pred_region
        // Predicated region
        $region29: #{modality_drop_augmentation.1} parent=16 // pred_check
          _
        $region30: #{modality_drop_augmentation.1} parent=16 // pred_check_branch
          %49 = sbr.rel (0) target = $region32
        $region31: #{modality_drop_augmentation.1} parent=16 // pred_region
          %s51 = ssub.s32 16, 1
          loop: start=0, step=1, limit=1
          $region33: #{modality_drop_augmentation.1} parent=31 // loop_pre_header
            _
          $region34: #{modality_drop_augmentation.1} parent=31 // loop_header
            %s53 = sphi 0, %s57
            %p54 = scmp.ge.s32.totalorder %s53, 1
            %s58 = sphi [#allocation2], [#allocation2]
            %s59 = sphi %s3, %s3
          $region35: #{modality_drop_augmentation.1} parent=31 // loop_header_branch
            %56 = sbr.rel (%p54) target = $region39
          $region36: #{modality_drop_augmentation.1} parent=31 // loop_body
            %v60 = vld [vmem:[%s58] sm:%s51]
            %61 = vst [vmem:[%s59] sm:%s51] %v60
          $region37: #{modality_drop_augmentation.1} parent=31 // loop_footer
            %s57 = sadd.s32 1, %s53
          $region38: #{modality_drop_augmentation.1} parent=31 // loop_footer_branch
            %52 = sbr.rel target = $region34
          $region39: #{modality_drop_augmentation.1} parent=31 // loop_exit
            _
        $region32: #{modality_drop_augmentation.1} parent=16 // pred_fallthru
          _
      $region17: #{modality_drop_augmentation.1} parent=12 // pred_fallthru
        _
      // Predicated region
      $region18: #{modality_drop_augmentation.1} parent=12 // pred_check
        _
      $region19: #{modality_drop_augmentation.1} parent=12 // pred_check_branch
        %35 = sbr.rel (0) target = $region21
      $region20: #{modality_drop_augmentation.1} parent=12 // pred_region
        %s37 = ssub.s32 16, 1
        loop: start=0, step=1, limit=1
        $region22: #{modality_drop_augmentation.1} parent=20 // loop_pre_header
          _
        $region23: #{modality_drop_augmentation.1} parent=20 // loop_header
          %s39 = sphi 0, %s43
          %p40 = scmp.ge.s32.totalorder %s39, 1
          %s44 = sphi [#allocation2], [#allocation2]
          %s45 = sphi %s3, %s3
        $region24: #{modality_drop_augmentation.1} parent=20 // loop_header_branch
          %42 = sbr.rel (%p40) target = $region28
        $region25: #{modality_drop_augmentation.1} parent=20 // loop_body
          %v46 = vld [vmem:[%s44] sm:%s37]
          %47 = vst [vmem:[%s45] sm:%s37] %v46
        $region26: #{modality_drop_augmentation.1} parent=20 // loop_footer
          %s43 = sadd.s32 1, %s39
        $region27: #{modality_drop_augmentation.1} parent=20 // loop_footer_branch
          %38 = sbr.rel target = $region23
        $region28: #{modality_drop_augmentation.1} parent=20 // loop_exit
          _
      $region21: #{modality_drop_augmentation.1} parent=12 // pred_fallthru
        _
      // Predicated region
      $region40: #{modality_drop_augmentation.1} parent=12 // pred_check
        _
      $region41: #{modality_drop_augmentation.1} parent=12 // pred_check_branch
        %64 = sbr.rel (0) target = $region43
      $region42: #{modality_drop_augmentation.1} parent=12 // pred_region
        %65 = vsyncadd [#allocation3], 64
      $region43: #{modality_drop_augmentation.1} parent=12 // pred_fallthru
        _
      %s66 = smul.u32 4, 1
      %s67 = sshll.u32 %s66, 4
      %68 = dma.done [#allocation3], %s67
    $region13: #{modality_drop_augmentation.1} parent=1 // pred_fallthru
      _
    %s69 = sld [smem:[#allocation4 + $0x1]]
    %p70 = scmp.ne.s32.totalorder %s69, 0
    // Predicated region
    $region44: #{modality_drop_augmentation.1} parent=1 // pred_check
      %p71 = pneg %p70
    $region45: #{modality_drop_augmentation.1} parent=1 // pred_check_branch
      %73 = sbr.rel (%p71) target = $region47
    $region46: #{modality_drop_augmentation.1} parent=1 // pred_region
      %74 = vst [vmem:[#allocation2] sm:$0xff] 0.0
      %75 = vst [vmem:[#allocation2 + $0x8] sm:$0xff] 0.0
      // Predicated region
      $region48: #{modality_drop_augmentation.1} parent=46 // pred_check
        _
      $region49: #{modality_drop_augmentation.1} parent=46 // pred_check_branch
        %77 = sbr.rel (0) target = $region51
      $region50: #{modality_drop_augmentation.1} parent=46 // pred_region
        loop: start=0, step=1, limit=1
        $region52: #{modality_drop_augmentation.1} parent=50 // loop_pre_header
          _
        $region53: #{modality_drop_augmentation.1} parent=50 // loop_header
          %s79 = sphi 0, %s83
          %p80 = scmp.ge.s32.totalorder %s79, 1
          %s84 = sphi [#allocation2], [#allocation2]
          %s85 = sphi %s4, %s4
        $region54: #{modality_drop_augmentation.1} parent=50 // loop_header_branch
          %82 = sbr.rel (%p80) target = $region58
        $region55: #{modality_drop_augmentation.1} parent=50 // loop_body
          %v86 = vld [vmem:[%s84] sm:$0xff]
          %87 = vst [vmem:[%s85] sm:$0xff] %v86
          %v88 = vld [vmem:[%s84 + $0x8] sm:$0xff]
          %89 = vst [vmem:[%s85 + $0x8] sm:$0xff] %v88
        $region56: #{modality_drop_augmentation.1} parent=50 // loop_footer
          %s83 = sadd.s32 1, %s79
        $region57: #{modality_drop_augmentation.1} parent=50 // loop_footer_branch
          %78 = sbr.rel target = $region53
        $region58: #{modality_drop_augmentation.1} parent=50 // loop_exit
          _
      $region51: #{modality_drop_augmentation.1} parent=46 // pred_fallthru
        _
      // Predicated region
      $region59: #{modality_drop_augmentation.1} parent=46 // pred_check
        _
      $region60: #{modality_drop_augmentation.1} parent=46 // pred_check_branch
        %91 = sbr.rel target = $region62
      $region61: #{modality_drop_augmentation.1} parent=46 // pred_region
        _
      $region62: #{modality_drop_augmentation.1} parent=46 // pred_fallthru
        _
      // Predicated region
      $region63: #{modality_drop_augmentation.1} parent=46 // pred_check
        _
      $region64: #{modality_drop_augmentation.1} parent=46 // pred_check_branch
        %94 = sbr.rel (0) target = $region66
      $region65: #{modality_drop_augmentation.1} parent=46 // pred_region
        %95 = vsyncadd [#allocation3], 256
      $region66: #{modality_drop_augmentation.1} parent=46 // pred_fallthru
        _
      %s96 = smul.u32 16, 1
      %s97 = sshll.u32 %s96, 4
      %98 = dma.done [#allocation3], %s97
    $region47: #{modality_drop_augmentation.1} parent=1 // pred_fallthru
      _
    %99 = vsyncpa [#allocation5], 1
  %100 = vsyncmov [#allocation3]
  %s101 = vpop.sfrf %100
  %p102 = scmp.eq.s32.totalorder %s101, 0
  %p103 = pneg %p102
  %105 = shalt.err (%p103)

</llo_original>
